<compile_context>
chip_gen: v5e
topology: v5e:2x2
jax: 0.10.0
libtpu: 0.0.40
codegen_flags: <defaults>
</compile_context>

<pallas_src>
import jax
import jax.numpy as jnp
from jax.experimental import pallas as pl
from jax.experimental.pallas import tpu as pltpu

_LANE = 128
_SUBLANE = 8


def _round_up(n, m):
    return ((n + m - 1) // m) * m


def _policy_net_kernel(x_ref, w1_ref, b1_ref, w2_ref, b2_ref, out_ref):
    # fc1: (TB, Sp) @ (Sp, H) + (1, H)  -> ReLU   (f32 accumulation on MXU)
    h = jnp.dot(x_ref[...], w1_ref[...], preferred_element_type=jnp.float32)
    h = jnp.maximum(h + b1_ref[...], 0.0)
    # fc2: (TB, H) @ (H, Ap) + (1, Ap)   (raw action values, no activation)
    out = jnp.dot(h, w2_ref[...], preferred_element_type=jnp.float32)
    out_ref[...] = (out + b2_ref[...]).astype(out_ref.dtype)


def policy_network_forward(x, w1, b1, w2, b2, *, block_b=256):
    """Fused forward pass.

    x : (B, num_states) float32
    w1: (num_states, 128), b1: (1, 128)
    w2: (128, num_actions), b2: (1, num_actions)
    Returns (B, num_actions) float32, identical to
    relu(x @ w1 + b1) @ w2 + b2.
    """
    B, S = x.shape
    H = w1.shape[1]
    A = w2.shape[1]

    # Lane-dense padding (zeros do not change the math) and batch tiling.
    S_p = _round_up(S, _LANE)
    A_p = _round_up(A, _LANE)
    TB = min(block_b, _round_up(B, _SUBLANE))   # multiple of 8 (f32 sublane)
    B_p = _round_up(B, TB)

    x_p = jnp.zeros((B_p, S_p), jnp.float32).at[:B, :S].set(x)
    w1_p = jnp.zeros((S_p, H), jnp.float32).at[:S, :].set(w1)
    b1_p = b1.reshape(1, H).astype(jnp.float32)
    w2_p = jnp.zeros((H, A_p), jnp.float32).at[:, :A].set(w2)
    b2_p = jnp.zeros((1, A_p), jnp.float32).at[:, :A].set(b2.reshape(1, A))

    grid = (B_p // TB,)
    out_p = pl.pallas_call(
        _policy_net_kernel,
        out_shape=jax.ShapeDtypeStruct((B_p, A_p), jnp.float32),
        grid=grid,
        in_specs=[
            pl.BlockSpec((TB, S_p), lambda i: (i, 0)),   # x: tiled over batch
            pl.BlockSpec((S_p, H), lambda i: (0, 0)),    # W1: resident
            pl.BlockSpec((1, H), lambda i: (0, 0)),      # b1: resident
            pl.BlockSpec((H, A_p), lambda i: (0, 0)),    # W2: resident
            pl.BlockSpec((1, A_p), lambda i: (0, 0)),    # b2: resident
        ],
        out_specs=pl.BlockSpec((TB, A_p), lambda i: (i, 0)),
        compiler_params=pltpu.CompilerParams(
            dimension_semantics=("parallel",),           # 2-TC sharding on v7x
        ),
    )(x_p, w1_p, b1_p, w2_p, b2_p)

    return out_p[:B, :A]


def init_params(key, num_states, num_actions, hidden=128):
    """Synthetic init matching nn.Linear shapes (fc1: S->128, fc2: 128->A).
    Weights stored as (in_features, out_features): x @ W == x @ W_torch.T."""
    k1, k2, k3, k4 = jax.random.split(key, 4)
    lim1 = 1.0 / jnp.sqrt(num_states)
    lim2 = 1.0 / jnp.sqrt(hidden)
    w1 = jax.random.uniform(k1, (num_states, hidden), jnp.float32, -lim1, lim1)
    b1 = jax.random.uniform(k2, (1, hidden), jnp.float32, -lim1, lim1)
    w2 = jax.random.uniform(k3, (hidden, num_actions), jnp.float32, -lim2, lim2)
    b2 = jax.random.uniform(k4, (1, num_actions), jnp.float32, -lim2, lim2)
    return w1, b1, w2, b2


if __name__ == "__main__":
    num_states = 8      # small observation vector
    num_actions = 4     # small discrete action space
    batch = 32          # e.g. a replay-buffer minibatch

    key = jax.random.PRNGKey(0)
    kx, kp = jax.random.split(key)
    x = jax.random.normal(kx, (batch, num_states), dtype=jnp.float32)
    w1, b1, w2, b2 = init_params(kp, num_states, num_actions)

    out = policy_network_forward(x, w1, b1, w2, b2)
    out = jax.block_until_ready(out)

    # Pure-JAX reference (same math as the PyTorch forward).
    ref = jnp.maximum(x @ w1 + b1, 0.0) @ w2 + b2
    assert out.shape == (batch, num_actions)
    assert jnp.allclose(out, ref, atol=1e-5, rtol=1e-5)

    # Also exercise the tiled path with a large training-sized batch
    # (multiple grid steps, TB=256) to confirm the pipelined spec is sound.
    big_b = 1000
    xb = jax.random.normal(kx, (big_b, num_states), dtype=jnp.float32)
    outb = jax.block_until_ready(policy_network_forward(xb, w1, b1, w2, b2))
    refb = jnp.maximum(xb @ w1 + b1, 0.0) @ w2 + b2
    assert outb.shape == (big_b, num_actions)
    assert jnp.allclose(outb, refb, atol=1e-5, rtol=1e-5)

    print("KERNEL_OK")
</pallas_src>

<mosaic_0001>
module attributes {stable_mosaic.version = 11 : i64} {
  func.func @_policy_net_kernel(%arg0: i32, %arg1: memref<32x128xf32, #tpu.memory_space<vmem>>, %arg2: memref<128x128xf32, #tpu.memory_space<vmem>>, %arg3: memref<1x128xf32, #tpu.memory_space<vmem>>, %arg4: memref<128x128xf32, #tpu.memory_space<vmem>>, %arg5: memref<1x128xf32, #tpu.memory_space<vmem>>, %arg6: memref<32x128xf32, #tpu.memory_space<vmem>>) attributes {dimension_semantics = [#tpu.dimension_semantics<parallel>], iteration_bounds = array<i64: 1>, scalar_prefetch = 0 : i64, scratch_operands = 0 : i64, tpu.core_type = #tpu.core_type<tc>, window_params = [{transform_indices = @transform_0, window_bounds = array<i64: 32, 128>}, {pipeline_mode = #tpu.pipeline_mode<synchronous>, transform_indices = @transform_1, window_bounds = array<i64: 128, 128>}, {pipeline_mode = #tpu.pipeline_mode<synchronous>, transform_indices = @transform_2, window_bounds = array<i64: 1, 128>}, {pipeline_mode = #tpu.pipeline_mode<synchronous>, transform_indices = @transform_3, window_bounds = array<i64: 128, 128>}, {pipeline_mode = #tpu.pipeline_mode<synchronous>, transform_indices = @transform_4, window_bounds = array<i64: 1, 128>}, {transform_indices = @transform_5, window_bounds = array<i64: 32, 128>}]} {
    %c0 = arith.constant 0 : index
    %c0_0 = arith.constant 0 : index
    %0 = vector.load %arg1[%c0, %c0_0] : memref<32x128xf32, #tpu.memory_space<vmem>>, vector<32x128xf32>
    %c0_1 = arith.constant 0 : index
    %c0_2 = arith.constant 0 : index
    %1 = vector.load %arg2[%c0_1, %c0_2] : memref<128x128xf32, #tpu.memory_space<vmem>>, vector<128x128xf32>
    %cst = arith.constant dense<0.000000e+00> : vector<32x128xf32>
    %2 = tpu.matmul %0, %1, %cst {dimension_numbers = #tpu.dot_dimension_numbers<[1], [0], [0], [1], [0, 0, 1, 1], [], []>} : vector<32x128xf32>, vector<128x128xf32>, vector<32x128xf32> -> vector<32x128xf32>
    %c0_3 = arith.constant 0 : index
    %c0_4 = arith.constant 0 : index
    %3 = vector.load %arg3[%c0_3, %c0_4] : memref<1x128xf32, #tpu.memory_space<vmem>>, vector<1x128xf32>
    %4 = vector.broadcast %3 : vector<1x128xf32> to vector<32x128xf32>
    %5 = arith.addf %2, %4 : vector<32x128xf32>
    %cst_5 = arith.constant 0.000000e+00 : f32
    %6 = vector.broadcast %cst_5 : f32 to vector<32x128xf32>
    %7 = arith.maximumf %5, %6 : vector<32x128xf32>
    %c0_6 = arith.constant 0 : index
    %c0_7 = arith.constant 0 : index
    %8 = vector.load %arg4[%c0_6, %c0_7] : memref<128x128xf32, #tpu.memory_space<vmem>>, vector<128x128xf32>
    %cst_8 = arith.constant dense<0.000000e+00> : vector<32x128xf32>
    %9 = tpu.matmul %7, %8, %cst_8 {dimension_numbers = #tpu.dot_dimension_numbers<[1], [0], [0], [1], [0, 0, 1, 1], [], []>} : vector<32x128xf32>, vector<128x128xf32>, vector<32x128xf32> -> vector<32x128xf32>
    %c0_9 = arith.constant 0 : index
    %c0_10 = arith.constant 0 : index
    %10 = vector.load %arg5[%c0_9, %c0_10] : memref<1x128xf32, #tpu.memory_space<vmem>>, vector<1x128xf32>
    %11 = vector.broadcast %10 : vector<1x128xf32> to vector<32x128xf32>
    %12 = arith.addf %9, %11 : vector<32x128xf32>
    %c0_11 = arith.constant 0 : index
    %c0_12 = arith.constant 0 : index
    %13 = vector.load %arg6[%c0_11, %c0_12] : memref<32x128xf32, #tpu.memory_space<vmem>>, vector<32x128xf32>
    tpu.vector_store %arg6[%c0_11, %c0_12], %12 {strides = array<i32>} : memref<32x128xf32, #tpu.memory_space<vmem>>, vector<32x128xf32>,
    return
  }
  func.func @transform_0(%arg0: i32) -> (i32, i32) {
    %c0_i32 = arith.constant 0 : i32
    %c0_i32_0 = arith.constant 0 : i32
    return %arg0, %c0_i32 : i32, i32
  }
  func.func @transform_1(%arg0: i32) -> (i32, i32) {
    %c0_i32 = arith.constant 0 : i32
    %c0_i32_0 = arith.constant 0 : i32
    %c0_i32_1 = arith.constant 0 : i32
    return %c0_i32, %c0_i32_0 : i32, i32
  }
  func.func @transform_2(%arg0: i32) -> (i32, i32) {
    %c0_i32 = arith.constant 0 : i32
    %c0_i32_0 = arith.constant 0 : i32
    %c0_i32_1 = arith.constant 0 : i32
    return %c0_i32, %c0_i32_0 : i32, i32
  }
  func.func @transform_3(%arg0: i32) -> (i32, i32) {
    %c0_i32 = arith.constant 0 : i32
    %c0_i32_0 = arith.constant 0 : i32
    %c0_i32_1 = arith.constant 0 : i32
    return %c0_i32, %c0_i32_0 : i32, i32
  }
  func.func @transform_4(%arg0: i32) -> (i32, i32) {
    %c0_i32 = arith.constant 0 : i32
    %c0_i32_0 = arith.constant 0 : i32
    %c0_i32_1 = arith.constant 0 : i32
    return %c0_i32, %c0_i32_0 : i32, i32
  }
  func.func @transform_5(%arg0: i32) -> (i32, i32) {
    %c0_i32 = arith.constant 0 : i32
    %c0_i32_0 = arith.constant 0 : i32
    return %arg0, %c0_i32 : i32, i32
  }
}

</mosaic_0001>

<llo_original>
// kernel: tpu_custom_call.1
$region0: #{tpu_custom_call.1}
  #allocation0 [shape = 'u32[]', space=smem, size = 0x4, offset = 0x4, fixed_abs, tag = 'smem constant byte address 0x4 - core index']
  #allocation1 [shape = 'u32[72,128]{1,0:T(1,128)}', space=vmem, size = 0x9000, scoped, tag = 'internal scratch']
  %s0 = inlined_call_operand.hbm [shape: f32[32,128], index: 0, kind: input, shape index: {}]
  %s1 = inlined_call_operand.hbm [shape: f32[128,128], index: 1, kind: input, shape index: {}]
  %s2 = inlined_call_operand.vmem [shape: f32[1,128], index: 2, kind: input, shape index: {}]
  %s3 = inlined_call_operand.hbm [shape: f32[128,128], index: 3, kind: input, shape index: {}]
  %s4 = inlined_call_operand.vmem [shape: f32[1,128], index: 4, kind: input, shape index: {}]
  %s5 = inlined_call_operand.hbm [shape: f32[32,128], index: 5, kind: output, shape index: {}]
  %s6 = sld [smem:[#allocation0]]
  $region42: #{tpu_custom_call.1} parent=0
    _
  %s8 = ssub.s32 1, %s6
  %s9 = scalar_select 0, %s8, %s6
  $region1: #{tpu_custom_call.1} parent=0
    #allocation2 [shape = 'u8[16384]{0}', space=vmem, size = 0x4000, scoped, tag = 'input window, operand 0, single buffered']
    #allocation3 [shape = 's32[1]{0}', space=sflag, size = 0x4, scoped, tag = 'scoped memory for tpu_custom_call.1']
    #allocation4 [shape = 's32[1]{0}', space=sflag, size = 0x4, scoped, tag = 'scoped memory for tpu_custom_call.1']
    #allocation5 [shape = 'u8[65536]{0}', space=vmem, size = 0x10000, scoped, tag = 'input window, operand 1, single buffered']
    #allocation6 [shape = 's32[1]{0}', space=sflag, size = 0x4, scoped, tag = 'scoped memory for tpu_custom_call.1']
    #allocation7 [shape = 'u8[65536]{0}', space=vmem, size = 0x10000, scoped, tag = 'input window, operand 3, single buffered']
    #allocation8 [shape = 'u8[16384]{0}', space=vmem, size = 0x4000, scoped, tag = 'output window, operand 0, single buffered']
    %10 = vsyncpa [#allocation3], 0
    %11 = vsyncpa [#allocation6], 0
    %12 = vsyncpa [#allocation4], 0
    // Predicated region
    $region2: #{tpu_custom_call.1} parent=1 // pred_check
      _
    $region3: #{tpu_custom_call.1} parent=1 // pred_check_branch
      %14 = sbr.rel (0) target = $region5
    $region4: #{tpu_custom_call.1} parent=1 // pred_region
      %16 = vsyncadd [#allocation3], 0
      %s17 = sshll.u32 %s0, 4
      %s18 = int_to_ptr.hbm [resolvable:$true] %s17
      %s19 = sshll.u32 [#allocation2], 4
      %s20 = int_to_ptr.vmem [resolvable:$true] %s19
      %25 = dma.hbm_to_vmem [thread:$0]  %s18, 512, %s20, [#allocation3], 128, 128, 8
    $region5: #{tpu_custom_call.1} parent=1 // pred_fallthru
      _
    // Predicated region
    $region6: #{tpu_custom_call.1} parent=1 // pred_check
      _
    $region7: #{tpu_custom_call.1} parent=1 // pred_check_branch
      %27 = sbr.rel (0) target = $region9
    $region8: #{tpu_custom_call.1} parent=1 // pred_region
      %29 = vsyncadd [#allocation6], 0
      %s30 = sshll.u32 %s1, 4
      %s31 = int_to_ptr.hbm [resolvable:$true] %s30
      %s32 = sshll.u32 [#allocation5], 4
      %s33 = int_to_ptr.vmem [resolvable:$true] %s32
      %38 = dma.hbm_to_vmem [thread:$0]  %s31, 2048, %s33, [#allocation6], 128, 128, 8
    $region9: #{tpu_custom_call.1} parent=1 // pred_fallthru
      _
    // Predicated region
    $region10: #{tpu_custom_call.1} parent=1 // pred_check
      _
    $region11: #{tpu_custom_call.1} parent=1 // pred_check_branch
      %40 = sbr.rel (0) target = $region13
    $region12: #{tpu_custom_call.1} parent=1 // pred_region
      _
    $region13: #{tpu_custom_call.1} parent=1 // pred_fallthru
      _
    // Predicated region
    $region14: #{tpu_custom_call.1} parent=1 // pred_check
      _
    $region15: #{tpu_custom_call.1} parent=1 // pred_check_branch
      %42 = sbr.rel (0) target = $region17
    $region16: #{tpu_custom_call.1} parent=1 // pred_region
      %44 = vsyncadd [#allocation6], 0
      %s45 = sshll.u32 %s3, 4
      %s46 = int_to_ptr.hbm [resolvable:$true] %s45
      %s47 = sshll.u32 [#allocation7], 4
      %s48 = int_to_ptr.vmem [resolvable:$true] %s47
      %53 = dma.hbm_to_vmem [thread:$0]  %s46, 2048, %s48, [#allocation6], 128, 128, 8
    $region17: #{tpu_custom_call.1} parent=1 // pred_fallthru
      _
    // Predicated region
    $region18: #{tpu_custom_call.1} parent=1 // pred_check
      _
    $region19: #{tpu_custom_call.1} parent=1 // pred_check_branch
      %55 = sbr.rel (0) target = $region21
    $region20: #{tpu_custom_call.1} parent=1 // pred_region
      _
    $region21: #{tpu_custom_call.1} parent=1 // pred_fallthru
      _
    // Predicated region
    $region22: #{tpu_custom_call.1} parent=1 // pred_check
      _
    $region23: #{tpu_custom_call.1} parent=1 // pred_check_branch
      %57 = sbr.rel (0) target = $region25
    $region24: #{tpu_custom_call.1} parent=1 // pred_region
      %59 = dma.done [#allocation3], 512
    $region25: #{tpu_custom_call.1} parent=1 // pred_fallthru
      _
    // Predicated region
    $region26: #{tpu_custom_call.1} parent=1 // pred_check
      _
    $region27: #{tpu_custom_call.1} parent=1 // pred_check_branch
      %61 = sbr.rel (0) target = $region29
    $region28: #{tpu_custom_call.1} parent=1 // pred_region
      %63 = dma.done [#allocation6], 2048
    $region29: #{tpu_custom_call.1} parent=1 // pred_fallthru
      _
    // Predicated region
    $region30: #{tpu_custom_call.1} parent=1 // pred_check
      _
    $region31: #{tpu_custom_call.1} parent=1 // pred_check_branch
      %65 = sbr.rel (0) target = $region33
    $region32: #{tpu_custom_call.1} parent=1 // pred_region
      %67 = dma.done [#allocation6], 2048
    $region33: #{tpu_custom_call.1} parent=1 // pred_fallthru
      _
    %v68 = vld [vmem:[#allocation2] sm:$0xff]
    %v69 = vld [vmem:[#allocation2 + $0x8] sm:$0xff]
    %v70 = vld [vmem:[#allocation2 + $0x10] sm:$0xff]
    %v71 = vld [vmem:[#allocation2 + $0x18] sm:$0xff]
    %v72 = vld [vmem:[#allocation5] sm:$0xff]
    %v73 = vld [vmem:[#allocation5 + $0x8] sm:$0xff]
    %v74 = vld [vmem:[#allocation5 + $0x10] sm:$0xff]
    %v75 = vld [vmem:[#allocation5 + $0x18] sm:$0xff]
    %v76 = vld [vmem:[#allocation5 + $0x20] sm:$0xff]
    %v77 = vld [vmem:[#allocation5 + $0x28] sm:$0xff]
    %v78 = vld [vmem:[#allocation5 + $0x30] sm:$0xff]
    %v79 = vld [vmem:[#allocation5 + $0x38] sm:$0xff]
    %v80 = vld [vmem:[#allocation5 + $0x40] sm:$0xff]
    %v81 = vld [vmem:[#allocation5 + $0x48] sm:$0xff]
    %v82 = vld [vmem:[#allocation5 + $0x50] sm:$0xff]
    %v83 = vld [vmem:[#allocation5 + $0x58] sm:$0xff]
    %v84 = vld [vmem:[#allocation5 + $0x60] sm:$0xff]
    %v85 = vld [vmem:[#allocation5 + $0x68] sm:$0xff]
    %v86 = vld [vmem:[#allocation5 + $0x70] sm:$0xff]
    %v87 = vld [vmem:[#allocation5 + $0x78] sm:$0xff]
    %v88 = vld [vmem:[%s2] sm:$0x1]
    %v90 = vperm.slane %v88, 0
    %92 = vmatpush.msra.mxu0 %v87
    %93 = vmatpush.msra.mxu0 %v86
    %94 = vmatpush.msra.mxu0 %v85
    %95 = vmatpush.msra.mxu0 %v84
    %96 = vmatpush.msra.mxu0 %v83
    %97 = vmatpush.msra.mxu0 %v82
    %98 = vmatpush.msra.mxu0 %v81
    %99 = vmatpush.msra.mxu0 %v80
    %100 = vmatpush.msra.mxu0 %v79
    %101 = vmatpush.msra.mxu0 %v78
    %102 = vmatpush.msra.mxu0 %v77
    %103 = vmatpush.msra.mxu0 %v76
    %104 = vmatpush.msra.mxu0 %v75
    %105 = vmatpush.msra.mxu0 %v74
    %106 = vmatpush.msra.mxu0 %v73
    %107 = vmatpush.msra.mxu0 %v72
    %108 = vmatmul.f32.gmra.mxu0 %v68
    %v109 = vpop.f32.mrf.mxu0
    %v110 = vadd.f32 %v90, %v109
    %111 = vmatmul.f32.gmra.mxu0 %v69
    %v112 = vpop.f32.mrf.mxu0
    %v113 = vadd.f32 %v90, %v112
    %114 = vmatmul.f32.gmra.mxu0 %v70
    %v115 = vpop.f32.mrf.mxu0
    %v116 = vadd.f32 %v90, %v115
    %117 = vmatmul.f32.gmra.mxu0 %v71
    %v118 = vpop.f32.mrf.mxu0
    %v119 = vadd.f32 %v90, %v118
    %120 = vdwg.mxu0
    %v121 = vmax.f32 %v110, 0.0
    %v122 = vmax.f32 %v113, 0.0
    %v123 = vmax.f32 %v116, 0.0
    %v124 = vmax.f32 %v119, 0.0
    %v125 = vld [vmem:[#allocation7] sm:$0xff]
    %v126 = vld [vmem:[#allocation7 + $0x8] sm:$0xff]
    %v127 = vld [vmem:[#allocation7 + $0x10] sm:$0xff]
    %v128 = vld [vmem:[#allocation7 + $0x18] sm:$0xff]
    %v129 = vld [vmem:[#allocation7 + $0x20] sm:$0xff]
    %v130 = vld [vmem:[#allocation7 + $0x28] sm:$0xff]
    %v131 = vld [vmem:[#allocation7 + $0x30] sm:$0xff]
    %v132 = vld [vmem:[#allocation7 + $0x38] sm:$0xff]
    %v133 = vld [vmem:[#allocation7 + $0x40] sm:$0xff]
    %v134 = vld [vmem:[#allocation7 + $0x48] sm:$0xff]
    %v135 = vld [vmem:[#allocation7 + $0x50] sm:$0xff]
    %v136 = vld [vmem:[#allocation7 + $0x58] sm:$0xff]
    %v137 = vld [vmem:[#allocation7 + $0x60] sm:$0xff]
    %v138 = vld [vmem:[#allocation7 + $0x68] sm:$0xff]
    %v139 = vld [vmem:[#allocation7 + $0x70] sm:$0xff]
    %v140 = vld [vmem:[#allocation7 + $0x78] sm:$0xff]
    %v141 = vld [vmem:[%s4] sm:$0x1]
    %v143 = vperm.slane %v141, 0
    %145 = vmatpush.msra.mxu0 %v140
    %146 = vmatpush.msra.mxu0 %v139
    %147 = vmatpush.msra.mxu0 %v138
    %148 = vmatpush.msra.mxu0 %v137
    %149 = vmatpush.msra.mxu0 %v136
    %150 = vmatpush.msra.mxu0 %v135
    %151 = vmatpush.msra.mxu0 %v134
    %152 = vmatpush.msra.mxu0 %v133
    %153 = vmatpush.msra.mxu0 %v132
    %154 = vmatpush.msra.mxu0 %v131
    %155 = vmatpush.msra.mxu0 %v130
    %156 = vmatpush.msra.mxu0 %v129
    %157 = vmatpush.msra.mxu0 %v128
    %158 = vmatpush.msra.mxu0 %v127
    %159 = vmatpush.msra.mxu0 %v126
    %160 = vmatpush.msra.mxu0 %v125
    %161 = vmatmul.f32.gmra.mxu0 %v121
    %v162 = vpop.f32.mrf.mxu0
    %v163 = vadd.f32 %v143, %v162
    %164 = vmatmul.f32.gmra.mxu0 %v122
    %v165 = vpop.f32.mrf.mxu0
    %v166 = vadd.f32 %v143, %v165
    %167 = vmatmul.f32.gmra.mxu0 %v123
    %v168 = vpop.f32.mrf.mxu0
    %v169 = vadd.f32 %v143, %v168
    %170 = vmatmul.f32.gmra.mxu0 %v124
    %v171 = vpop.f32.mrf.mxu0
    %v172 = vadd.f32 %v143, %v171
    %173 = vdwg.mxu0
    %174 = vst [vmem:[#allocation8] sm:$0xff] %v163
    %175 = vst [vmem:[#allocation8 + $0x8] sm:$0xff] %v166
    %176 = vst [vmem:[#allocation8 + $0x10] sm:$0xff] %v169
    %177 = vst [vmem:[#allocation8 + $0x18] sm:$0xff] %v172
    // Predicated region
    $region34: #{tpu_custom_call.1} parent=1 // pred_check
      _
    $region35: #{tpu_custom_call.1} parent=1 // pred_check_branch
      %179 = sbr.rel (0) target = $region37
    $region36: #{tpu_custom_call.1} parent=1 // pred_region
      %181 = vsyncadd [#allocation4], 0
      %s182 = sshll.u32 [#allocation8], 4
      %s183 = int_to_ptr.vmem [resolvable:$true] %s182
      %s184 = sshll.u32 %s5, 4
      %s185 = int_to_ptr.hbm [resolvable:$true] %s184
      %190 = dma.vmem_to_hbm [thread:$0]  %s183, 512, %s185, [#allocation4], 128, 128, 8
    $region37: #{tpu_custom_call.1} parent=1 // pred_fallthru
      _
    // Predicated region
    $region38: #{tpu_custom_call.1} parent=1 // pred_check
      _
    $region39: #{tpu_custom_call.1} parent=1 // pred_check_branch
      %192 = sbr.rel (0) target = $region41
    $region40: #{tpu_custom_call.1} parent=1 // pred_region
      %194 = dma.done [#allocation4], 512
    $region41: #{tpu_custom_call.1} parent=1 // pred_fallthru
      _
    %195 = vsyncpa [#allocation3], 1
    %196 = vsyncpa [#allocation6], 1
    %197 = vsyncpa [#allocation4], 1

</llo_original>
